<compile_context>
chip_gen: v6e
topology: v6e:2x2x1
jax: 0.10.0
libtpu: 0.0.40
codegen_flags: <defaults>
</compile_context>

<pallas_src>
import jax
import jax.numpy as jnp
from jax.experimental import pallas as pl
from jax.experimental.pallas import tpu as pltpu


def _vq_kernel(z_ref, w_in_ref, b_in_ref, cbn_ref, cb_hi_ref, cb_lo_ref,
               w_out_ref, b_out_ref,
               zq_ref, ze_ref, zqc_ref, idx_ref):
    f32, bf16 = jnp.float32, jnp.bfloat16

    z = z_ref[0].astype(bf16)                                           # (D, T) bf16

    # in_proj (1x1 conv == matmul): (C, D) @ (D, T) -> (C, T), f32 accumulation
    ze = jnp.dot(w_in_ref[...], z, preferred_element_type=f32) + b_in_ref[...]
    ze_ref[0] = ze                                                      # (C, T) f32, T-last

    # l2-normalize encodings along C (rsqrt -> EUP slot)
    ssq = jnp.sum(ze * ze, axis=0, keepdims=True)                       # (1, T)
    ze_n = (ze * jax.lax.rsqrt(jnp.maximum(ssq, 1e-24))).astype(bf16)   # (C, T)

    # cosine similarity vs l2-normalized codebook; argmax(sim) == argmin(euclidean dist)
    sim = jnp.dot(cbn_ref[...], ze_n, preferred_element_type=f32)       # (N, T)
    n_codes = sim.shape[0]
    max_s = jnp.max(sim, axis=0, keepdims=True)                         # (1, T)
    iota = jax.lax.broadcasted_iota(jnp.int32, sim.shape, 0)            # (N, T)
    idx_row = jnp.min(jnp.where(sim == max_s, iota, n_codes),
                      axis=0, keepdims=True)                            # (1, T) first match
    idx_ref[0] = idx_row

    # codebook gather via one-hot matmul.  one-hot is exact in bf16; the codebook is split
    # into bf16 hi/lo halves so the gathered values are ~f32-exact without f32 MXU operands.
    onehot = (iota == idx_row).astype(bf16)                             # (N, T)
    zq_codes = (jnp.dot(cb_hi_ref[...], onehot, preferred_element_type=f32)
                + jnp.dot(cb_lo_ref[...], onehot, preferred_element_type=f32))   # (C, T)
    zqc_ref[0] = zq_codes

    # straight-through forward value == zq_codes; out_proj: (D, C) @ (C, T) -> (D, T)
    zq_out = jnp.dot(w_out_ref[...], zq_codes.astype(bf16),
                     preferred_element_type=f32) + b_out_ref[...]
    zq_ref[0] = zq_out


def _pad_len_and_tile(T):
    """Pad T to a multiple of 128 and pick the time-tile (capped at 256 for v7x VMEM)."""
    t_pad = pl.cdiv(T, 128) * 128
    tile = 256 if (t_pad % 256 == 0) else 128
    return t_pad, tile


def vector_quantize_forward(z, w_in, b_in, codebook, w_out, b_out):
    """DAC VectorQuantize forward.

    Args (PyTorch layouts):
      z:        (B, D, T) float32
      w_in:     (C, D)  effective (weight-normed) in_proj 1x1-conv weight
      b_in:     (C, 1)
      codebook: (N, C)
      w_out:    (D, C)  effective out_proj weight
      b_out:    (D, 1)

    Returns (z_q[B,D,T], commitment_loss[B], codebook_loss[B], indices[B,T], z_e[B,C,T]).
    """
    B, D, T = z.shape
    N, C = codebook.shape
    f32, bf16 = jnp.float32, jnp.bfloat16

    T_pad, tile_t = _pad_len_and_tile(T)
    n_t = T_pad // tile_t

    # ---- wrapper-side parameter prep (tiny, done once; no big-tensor layout passes) ----
    z_p = z.astype(f32)
    if T_pad != T:
        z_p = jnp.pad(z_p, ((0, 0), (0, 0), (0, T_pad - T)))            # zero-pad time axis

    w_in_bf = w_in.astype(bf16)                                         # (C, D)
    b_in_col = b_in.reshape(C, 1).astype(f32)                           # (C, 1)
    w_out_bf = w_out.astype(bf16)                                       # (D, C)
    b_out_col = b_out.reshape(D, 1).astype(f32)                         # (D, 1)

    cb = codebook.astype(f32)
    cb_ssq = jnp.sum(cb * cb, axis=1, keepdims=True)
    cbn = (cb * jax.lax.rsqrt(jnp.maximum(cb_ssq, 1e-24))).astype(bf16)  # (N, C) normalized
    cb_t = cb.T                                                          # (C, N)
    cb_hi = cb_t.astype(bf16)                                            # (C, N) bf16 hi
    cb_lo = (cb_t - cb_hi.astype(f32)).astype(bf16)                      # (C, N) bf16 lo

    out_shapes = (
        jax.ShapeDtypeStruct((B, D, T_pad), f32),        # z_q after out_proj (native layout)
        jax.ShapeDtypeStruct((B, C, T_pad), f32),        # z_e (native layout)
        jax.ShapeDtypeStruct((B, C, T_pad), f32),        # gathered codebook values (for loss)
        jax.ShapeDtypeStruct((B, 1, T_pad), jnp.int32),  # codebook indices (lane-dense)
    )

    # Rough per-step VMEM budget (double-buffered blocks + resident params + temporaries).
    step_bytes = (
        2 * D * tile_t * 4            # z in (f32)
        + 2 * D * tile_t * 4          # z_q out
        + 4 * C * tile_t * 4          # z_e + zq_codes out
        + 2 * tile_t * 4              # idx out
        + 2 * (2 * C * D * 2 + 3 * max(N, 128) * 128 * 2 + (C + D) * 4)   # params (lane-padded)
        + D * tile_t * (4 + 2)        # z bf16 copy + zq f32 temp
        + N * tile_t * (4 + 4 + 2)    # sim f32 + iota i32 + onehot bf16
    )
    vmem_limit = int(min(40 * 2 ** 20, max(16 * 2 ** 20, 2 * step_bytes)))

    flops = 2 * B * T_pad * C * (2 * D + 3 * N)          # in_proj + sim + hi/lo gather + out_proj
    bytes_accessed = (4 * B * T_pad * D                  # z in
                      + 4 * B * T_pad * D                # z_q out
                      + 2 * 4 * B * T_pad * C            # z_e + zq_codes out
                      + 4 * B * T_pad                    # idx out
                      + 2 * (4 * C * D + 6 * N * C) + 4 * (C + D))
    cost = pl.CostEstimate(flops=flops, transcendentals=B * T_pad,
                           bytes_accessed=bytes_accessed)

    zq_p, ze_p, zqc_p, idx_p = pl.pallas_call(
        _vq_kernel,
        out_shape=out_shapes,
        grid=(B, n_t),
        in_specs=[
            pl.BlockSpec((1, D, tile_t), lambda b, t: (b, 0, t)),   # z (native B, D, T)
            pl.BlockSpec((C, D), lambda b, t: (0, 0)),              # w_in
            pl.BlockSpec((C, 1), lambda b, t: (0, 0)),              # b_in
            pl.BlockSpec((N, C), lambda b, t: (0, 0)),              # normalized codebook (bf16)
            pl.BlockSpec((C, N), lambda b, t: (0, 0)),              # codebook^T hi (bf16)
            pl.BlockSpec((C, N), lambda b, t: (0, 0)),              # codebook^T lo (bf16)
            pl.BlockSpec((D, C), lambda b, t: (0, 0)),              # w_out
            pl.BlockSpec((D, 1), lambda b, t: (0, 0)),              # b_out
        ],
        out_specs=(
            pl.BlockSpec((1, D, tile_t), lambda b, t: (b, 0, t)),   # z_q
            pl.BlockSpec((1, C, tile_t), lambda b, t: (b, 0, t)),   # z_e
            pl.BlockSpec((1, C, tile_t), lambda b, t: (b, 0, t)),   # zq_codes
            pl.BlockSpec((1, 1, tile_t), lambda b, t: (b, 0, t)),   # indices
        ),
        compiler_params=pltpu.CompilerParams(
            dimension_semantics=("parallel", "parallel"),
            vmem_limit_bytes=vmem_limit,
        ),
        cost_estimate=cost,
    )(z_p, w_in_bf, b_in_col, cbn, cb_hi, cb_lo, w_out_bf, b_out_col)

    # Trim padding, compute per-batch losses in the wrapper (tiny C=8 streams).
    z_q = zq_p[:, :, :T]                                  # (B, D, T)
    z_e = ze_p[:, :, :T]                                  # (B, C, T)
    zq_codes = zqc_p[:, :, :T]                            # (B, C, T)
    indices = idx_p[:, 0, :T]                             # (B, T)

    diff = z_e - zq_codes
    loss = jnp.mean(diff * diff, axis=(1, 2))             # (B,)  mse over (C, T)
    # commitment_loss == codebook_loss in the forward pass (detach only affects gradients)
    return z_q, loss, loss, indices, z_e


def _reference_forward(z, w_in, b_in, codebook, w_out, b_out):
    """Pure-JAX f32 reference mirroring the PyTorch module's forward."""
    B, D, T = z.shape
    N, C = codebook.shape
    z_e = jnp.einsum('cd,bdt->bct', w_in, z) + b_in.reshape(1, C, 1)
    enc = jnp.transpose(z_e, (0, 2, 1)).reshape(B * T, C)
    enc_n = enc / jnp.maximum(jnp.linalg.norm(enc, axis=1, keepdims=True), 1e-12)
    cb_n = codebook / jnp.maximum(jnp.linalg.norm(codebook, axis=1, keepdims=True), 1e-12)
    dist = (jnp.sum(enc_n ** 2, 1, keepdims=True) - 2.0 * enc_n @ cb_n.T
            + jnp.sum(cb_n ** 2, 1, keepdims=True).T)
    indices = jnp.argmax(-dist, axis=1).reshape(B, T).astype(jnp.int32)
    zq_codes = jnp.transpose(codebook[indices], (0, 2, 1))               # (B, C, T)
    loss = jnp.mean((z_e - zq_codes) ** 2, axis=(1, 2))
    z_q = jnp.einsum('dc,bct->bdt', w_out, zq_codes) + b_out.reshape(1, D, 1)
    return z_q, loss, indices, z_e


def init_params(key, input_dim, codebook_size, codebook_dim):
    """Deterministic synthetic params mirroring the module's __init__ shapes.
    WNConv1d: effective weight = g * v / ||v|| (norm over (in, kernel) dims per out channel)."""
    ks = jax.random.split(key, 8)

    v_in = jax.random.normal(ks[0], (codebook_dim, input_dim, 1), dtype=jnp.float32) * 0.2
    g_in = jax.random.uniform(ks[1], (codebook_dim, 1, 1), minval=0.5, maxval=1.5, dtype=jnp.float32)
    w_in = (g_in * v_in / jnp.sqrt(jnp.sum(v_in * v_in, axis=(1, 2), keepdims=True)))[..., 0]  # (C, D)
    b_in = (jax.random.normal(ks[2], (codebook_dim,), dtype=jnp.float32) * 0.01).reshape(codebook_dim, 1)

    v_out = jax.random.normal(ks[3], (input_dim, codebook_dim, 1), dtype=jnp.float32) * 0.2
    g_out = jax.random.uniform(ks[4], (input_dim, 1, 1), minval=0.5, maxval=1.5, dtype=jnp.float32)
    w_out = (g_out * v_out / jnp.sqrt(jnp.sum(v_out * v_out, axis=(1, 2), keepdims=True)))[..., 0]  # (D, C)
    b_out = (jax.random.normal(ks[5], (input_dim,), dtype=jnp.float32) * 0.01).reshape(input_dim, 1)

    codebook = jax.random.normal(ks[6], (codebook_size, codebook_dim), dtype=jnp.float32)

    return w_in, b_in, codebook, w_out, b_out, ks[7]


if __name__ == "__main__":
    B, input_dim, T = 2, 32, 16
    codebook_size, codebook_dim = 64, 8

    key = jax.random.PRNGKey(0)
    w_in, b_in, codebook, w_out, b_out, kz = init_params(key, input_dim, codebook_size, codebook_dim)
    z = jax.random.normal(kz, (B, input_dim, T), dtype=jnp.float32)

    outs = vector_quantize_forward(z, w_in, b_in, codebook, w_out, b_out)
    outs = jax.block_until_ready(outs)
    z_q, commit_loss, cb_loss, indices, z_e = outs

    # shape / sanity checks
    assert z_q.shape == (B, input_dim, T)
    assert commit_loss.shape == (B,)
    assert cb_loss.shape == (B,)
    assert indices.shape == (B, T)
    assert z_e.shape == (B, codebook_dim, T)
    assert bool(jnp.all(indices >= 0)) and bool(jnp.all(indices < codebook_size))
    assert bool(jnp.all(jnp.isfinite(z_q))) and bool(jnp.all(jnp.isfinite(commit_loss)))

    # light numerical check vs an f32 reference (kernel uses bf16 MXU operands, so allow
    # loose tolerances; near-tied codes may flip indices, so require a high match fraction
    # and only compare z_q on frames whose indices agree).
    ref_zq, ref_loss, ref_idx, ref_ze = jax.block_until_ready(
        _reference_forward(z, w_in, b_in, codebook, w_out, b_out))
    match = float(jnp.mean((indices == ref_idx).astype(jnp.float32)))
    assert match >= 0.75, f"index match fraction too low: {match}"
    assert bool(jnp.allclose(z_e, ref_ze, rtol=5e-2, atol=5e-2))
    frame_ok = (indices == ref_idx)[:, None, :]
    zq_err = jnp.max(jnp.abs(jnp.where(frame_ok, z_q - ref_zq, 0.0)))
    assert float(zq_err) < 5e-2, f"z_q mismatch on index-matching frames: {float(zq_err)}"
    if match == 1.0:
        assert bool(jnp.allclose(commit_loss, ref_loss, rtol=1e-1, atol=1e-3))

    print("KERNEL_OK")
</pallas_src>

<mosaic_0001>
module attributes {stable_mosaic.version = 11 : i64} {
  func.func @_vq_kernel(%arg0: i32, %arg1: i32, %arg2: memref<1x32x128xf32, #tpu.memory_space<vmem>>, %arg3: memref<8x32xbf16, #tpu.memory_space<vmem>>, %arg4: memref<8x1xf32, #tpu.memory_space<vmem>>, %arg5: memref<64x8xbf16, #tpu.memory_space<vmem>>, %arg6: memref<8x64xbf16, #tpu.memory_space<vmem>>, %arg7: memref<8x64xbf16, #tpu.memory_space<vmem>>, %arg8: memref<32x8xbf16, #tpu.memory_space<vmem>>, %arg9: memref<32x1xf32, #tpu.memory_space<vmem>>, %arg10: memref<1x32x128xf32, #tpu.memory_space<vmem>>, %arg11: memref<1x8x128xf32, #tpu.memory_space<vmem>>, %arg12: memref<1x8x128xf32, #tpu.memory_space<vmem>>, %arg13: memref<1x1x128xi32, #tpu.memory_space<vmem>>) attributes {dimension_semantics = [#tpu.dimension_semantics<parallel>, #tpu.dimension_semantics<parallel>], iteration_bounds = array<i64: 2, 1>, scalar_prefetch = 0 : i64, scratch_operands = 0 : i64, tpu.core_type = #tpu.core_type<tc>, window_params = [{transform_indices = @transform_0, window_bounds = array<i64: 1, 32, 128>}, {pipeline_mode = #tpu.pipeline_mode<synchronous>, transform_indices = @transform_1, window_bounds = array<i64: 8, 32>}, {pipeline_mode = #tpu.pipeline_mode<synchronous>, transform_indices = @transform_2, window_bounds = array<i64: 8, 1>}, {pipeline_mode = #tpu.pipeline_mode<synchronous>, transform_indices = @transform_3, window_bounds = array<i64: 64, 8>}, {pipeline_mode = #tpu.pipeline_mode<synchronous>, transform_indices = @transform_4, window_bounds = array<i64: 8, 64>}, {pipeline_mode = #tpu.pipeline_mode<synchronous>, transform_indices = @transform_5, window_bounds = array<i64: 8, 64>}, {pipeline_mode = #tpu.pipeline_mode<synchronous>, transform_indices = @transform_6, window_bounds = array<i64: 32, 8>}, {pipeline_mode = #tpu.pipeline_mode<synchronous>, transform_indices = @transform_7, window_bounds = array<i64: 32, 1>}, {transform_indices = @transform_8, window_bounds = array<i64: 1, 32, 128>}, {transform_indices = @transform_9, window_bounds = array<i64: 1, 8, 128>}, {transform_indices = @transform_10, window_bounds = array<i64: 1, 8, 128>}, {transform_indices = @transform_11, window_bounds = array<i64: 1, 1, 128>}]} {
    %c0 = arith.constant 0 : index
    %c0_0 = arith.constant 0 : index
    %c0_1 = arith.constant 0 : index
    %0 = vector.load %arg2[%c0, %c0_0, %c0_1] : memref<1x32x128xf32, #tpu.memory_space<vmem>>, vector<1x32x128xf32>
    %1 = vector.shape_cast %0 : vector<1x32x128xf32> to vector<32x128xf32>
    %2 = arith.truncf %1 : vector<32x128xf32> to vector<32x128xbf16>
    %c0_2 = arith.constant 0 : index
    %c0_3 = arith.constant 0 : index
    %3 = vector.load %arg3[%c0_2, %c0_3] : memref<8x32xbf16, #tpu.memory_space<vmem>>, vector<8x32xbf16>
    %cst = arith.constant dense<0.000000e+00> : vector<8x128xf32>
    %4 = tpu.matmul %3, %2, %cst {dimension_numbers = #tpu.dot_dimension_numbers<[1], [0], [0], [1], [0, 0, 1, 1], [], []>} : vector<8x32xbf16>, vector<32x128xbf16>, vector<8x128xf32> -> vector<8x128xf32>
    %c0_4 = arith.constant 0 : index
    %c0_5 = arith.constant 0 : index
    %5 = vector.load %arg4[%c0_4, %c0_5] : memref<8x1xf32, #tpu.memory_space<vmem>>, vector<8x1xf32>
    %6 = vector.broadcast %5 : vector<8x1xf32> to vector<8x128xf32>
    %7 = arith.addf %4, %6 : vector<8x128xf32>
    %c0_6 = arith.constant 0 : index
    %c0_7 = arith.constant 0 : index
    %c0_8 = arith.constant 0 : index
    %8 = vector.load %arg11[%c0_6, %c0_7, %c0_8] : memref<1x8x128xf32, #tpu.memory_space<vmem>>, vector<1x8x128xf32>
    %9 = vector.shape_cast %8 : vector<1x8x128xf32> to vector<8x128xf32>
    %10 = vector.shape_cast %7 : vector<8x128xf32> to vector<1x8x128xf32>
    tpu.vector_store %arg11[%c0_6, %c0_7, %c0_8], %10 {strides = array<i32>} : memref<1x8x128xf32, #tpu.memory_space<vmem>>, vector<1x8x128xf32>,
    %11 = arith.mulf %7, %7 : vector<8x128xf32>
    %cst_9 = arith.constant dense<0.000000e+00> : vector<128xf32>
    %12 = vector.multi_reduction <add>, %11, %cst_9 [0] : vector<8x128xf32> to vector<128xf32>
    %13 = vector.shape_cast %12 : vector<128xf32> to vector<1x128xf32>
    %cst_10 = arith.constant 1.000000e-24 : f32
    %14 = vector.broadcast %cst_10 : f32 to vector<1x128xf32>
    %15 = arith.maximumf %13, %14 : vector<1x128xf32>
    %16 = math.rsqrt %15 : vector<1x128xf32>
    %17 = vector.broadcast %16 : vector<1x128xf32> to vector<8x128xf32>
    %18 = arith.mulf %7, %17 : vector<8x128xf32>
    %19 = arith.truncf %18 : vector<8x128xf32> to vector<8x128xbf16>
    %c0_11 = arith.constant 0 : index
    %c0_12 = arith.constant 0 : index
    %20 = vector.load %arg5[%c0_11, %c0_12] : memref<64x8xbf16, #tpu.memory_space<vmem>>, vector<64x8xbf16>
    %cst_13 = arith.constant dense<0.000000e+00> : vector<64x128xf32>
    %21 = tpu.matmul %20, %19, %cst_13 {dimension_numbers = #tpu.dot_dimension_numbers<[1], [0], [0], [1], [0, 0, 1, 1], [], []>} : vector<64x8xbf16>, vector<8x128xbf16>, vector<64x128xf32> -> vector<64x128xf32>
    %cst_14 = arith.constant dense<0xFF800000> : vector<128xf32>
    %22 = vector.multi_reduction <maximumf>, %21, %cst_14 [0] : vector<64x128xf32> to vector<128xf32>
    %23 = vector.shape_cast %22 : vector<128xf32> to vector<1x128xf32>
    %24 = tpu.iota {dimensions = array<i32: 0>} : vector<64x128xi32>
    %25 = vector.broadcast %23 : vector<1x128xf32> to vector<64x128xf32>
    %26 = arith.cmpf oeq, %21, %25 : vector<64x128xf32>
    %c64_i32 = arith.constant 64 : i32
    %27 = vector.broadcast %c64_i32 : i32 to vector<64x128xi32>
    %28 = arith.select %26, %24, %27 : vector<64x128xi1>, vector<64x128xi32>
    %cst_15 = arith.constant dense<2147483647> : vector<128xi32>
    %29 = vector.multi_reduction <minsi>, %28, %cst_15 [0] : vector<64x128xi32> to vector<128xi32>
    %30 = vector.shape_cast %29 : vector<128xi32> to vector<1x128xi32>
    %c0_16 = arith.constant 0 : index
    %c0_17 = arith.constant 0 : index
    %c0_18 = arith.constant 0 : index
    %31 = vector.load %arg13[%c0_16, %c0_17, %c0_18] : memref<1x1x128xi32, #tpu.memory_space<vmem>>, vector<1x1x128xi32>
    %32 = vector.shape_cast %31 : vector<1x1x128xi32> to vector<1x128xi32>
    %33 = vector.shape_cast %30 : vector<1x128xi32> to vector<1x1x128xi32>
    tpu.vector_store %arg13[%c0_16, %c0_17, %c0_18], %33 {strides = array<i32>} : memref<1x1x128xi32, #tpu.memory_space<vmem>>, vector<1x1x128xi32>,
    %34 = vector.broadcast %30 : vector<1x128xi32> to vector<64x128xi32>
    %35 = arith.cmpi eq, %24, %34 : vector<64x128xi32>
    %36 = arith.extui %35 : vector<64x128xi1> to vector<64x128xi32>
    %37 = arith.sitofp %36 : vector<64x128xi32> to vector<64x128xf32>
    %38 = arith.truncf %37 : vector<64x128xf32> to vector<64x128xbf16>
    %c0_19 = arith.constant 0 : index
    %c0_20 = arith.constant 0 : index
    %39 = vector.load %arg6[%c0_19, %c0_20] : memref<8x64xbf16, #tpu.memory_space<vmem>>, vector<8x64xbf16>
    %cst_21 = arith.constant dense<0.000000e+00> : vector<8x128xf32>
    %40 = tpu.matmul %39, %38, %cst_21 {dimension_numbers = #tpu.dot_dimension_numbers<[1], [0], [0], [1], [0, 0, 1, 1], [], []>} : vector<8x64xbf16>, vector<64x128xbf16>, vector<8x128xf32> -> vector<8x128xf32>
    %c0_22 = arith.constant 0 : index
    %c0_23 = arith.constant 0 : index
    %41 = vector.load %arg7[%c0_22, %c0_23] : memref<8x64xbf16, #tpu.memory_space<vmem>>, vector<8x64xbf16>
    %cst_24 = arith.constant dense<0.000000e+00> : vector<8x128xf32>
    %42 = tpu.matmul %41, %38, %cst_24 {dimension_numbers = #tpu.dot_dimension_numbers<[1], [0], [0], [1], [0, 0, 1, 1], [], []>} : vector<8x64xbf16>, vector<64x128xbf16>, vector<8x128xf32> -> vector<8x128xf32>
    %43 = arith.addf %40, %42 : vector<8x128xf32>
    %c0_25 = arith.constant 0 : index
    %c0_26 = arith.constant 0 : index
    %c0_27 = arith.constant 0 : index
    %44 = vector.load %arg12[%c0_25, %c0_26, %c0_27] : memref<1x8x128xf32, #tpu.memory_space<vmem>>, vector<1x8x128xf32>
    %45 = vector.shape_cast %44 : vector<1x8x128xf32> to vector<8x128xf32>
    %46 = vector.shape_cast %43 : vector<8x128xf32> to vector<1x8x128xf32>
    tpu.vector_store %arg12[%c0_25, %c0_26, %c0_27], %46 {strides = array<i32>} : memref<1x8x128xf32, #tpu.memory_space<vmem>>, vector<1x8x128xf32>,
    %c0_28 = arith.constant 0 : index
    %c0_29 = arith.constant 0 : index
    %47 = vector.load %arg8[%c0_28, %c0_29] : memref<32x8xbf16, #tpu.memory_space<vmem>>, vector<32x8xbf16>
    %48 = arith.truncf %43 : vector<8x128xf32> to vector<8x128xbf16>
    %cst_30 = arith.constant dense<0.000000e+00> : vector<32x128xf32>
    %49 = tpu.matmul %47, %48, %cst_30 {dimension_numbers = #tpu.dot_dimension_numbers<[1], [0], [0], [1], [0, 0, 1, 1], [], []>} : vector<32x8xbf16>, vector<8x128xbf16>, vector<32x128xf32> -> vector<32x128xf32>
    %c0_31 = arith.constant 0 : index
    %c0_32 = arith.constant 0 : index
    %50 = vector.load %arg9[%c0_31, %c0_32] : memref<32x1xf32, #tpu.memory_space<vmem>>, vector<32x1xf32>
    %51 = vector.broadcast %50 : vector<32x1xf32> to vector<32x128xf32>
    %52 = arith.addf %49, %51 : vector<32x128xf32>
    %c0_33 = arith.constant 0 : index
    %c0_34 = arith.constant 0 : index
    %c0_35 = arith.constant 0 : index
    %53 = vector.load %arg10[%c0_33, %c0_34, %c0_35] : memref<1x32x128xf32, #tpu.memory_space<vmem>>, vector<1x32x128xf32>
    %54 = vector.shape_cast %53 : vector<1x32x128xf32> to vector<32x128xf32>
    %55 = vector.shape_cast %52 : vector<32x128xf32> to vector<1x32x128xf32>
    tpu.vector_store %arg10[%c0_33, %c0_34, %c0_35], %55 {strides = array<i32>} : memref<1x32x128xf32, #tpu.memory_space<vmem>>, vector<1x32x128xf32>,
    return
  }
  func.func @transform_0(%arg0: i32, %arg1: i32) -> (i32, i32, i32) {
    %c0_i32 = arith.constant 0 : i32
    %c0_i32_0 = arith.constant 0 : i32
    return %arg0, %c0_i32, %arg1 : i32, i32, i32
  }
  func.func @transform_1(%arg0: i32, %arg1: i32) -> (i32, i32) {
    %c0_i32 = arith.constant 0 : i32
    %c0_i32_0 = arith.constant 0 : i32
    %c0_i32_1 = arith.constant 0 : i32
    return %c0_i32, %c0_i32_0 : i32, i32
  }
  func.func @transform_2(%arg0: i32, %arg1: i32) -> (i32, i32) {
    %c0_i32 = arith.constant 0 : i32
    %c0_i32_0 = arith.constant 0 : i32
    %c0_i32_1 = arith.constant 0 : i32
    return %c0_i32, %c0_i32_0 : i32, i32
  }
  func.func @transform_3(%arg0: i32, %arg1: i32) -> (i32, i32) {
    %c0_i32 = arith.constant 0 : i32
    %c0_i32_0 = arith.constant 0 : i32
    %c0_i32_1 = arith.constant 0 : i32
    return %c0_i32, %c0_i32_0 : i32, i32
  }
  func.func @transform_4(%arg0: i32, %arg1: i32) -> (i32, i32) {
    %c0_i32 = arith.constant 0 : i32
    %c0_i32_0 = arith.constant 0 : i32
    %c0_i32_1 = arith.constant 0 : i32
    return %c0_i32, %c0_i32_0 : i32, i32
  }
  func.func @transform_5(%arg0: i32, %arg1: i32) -> (i32, i32) {
    %c0_i32 = arith.constant 0 : i32
    %c0_i32_0 = arith.constant 0 : i32
    %c0_i32_1 = arith.constant 0 : i32
    return %c0_i32, %c0_i32_0 : i32, i32
  }
  func.func @transform_6(%arg0: i32, %arg1: i32) -> (i32, i32) {
    %c0_i32 = arith.constant 0 : i32
    %c0_i32_0 = arith.constant 0 : i32
    %c0_i32_1 = arith.constant 0 : i32
    return %c0_i32, %c0_i32_0 : i32, i32
  }
  func.func @transform_7(%arg0: i32, %arg1: i32) -> (i32, i32) {
    %c0_i32 = arith.constant 0 : i32
    %c0_i32_0 = arith.constant 0 : i32
    %c0_i32_1 = arith.constant 0 : i32
    return %c0_i32, %c0_i32_0 : i32, i32
  }
  func.func @transform_8(%arg0: i32, %arg1: i32) -> (i32, i32, i32) {
    %c0_i32 = arith.constant 0 : i32
    %c0_i32_0 = arith.constant 0 : i32
    return %arg0, %c0_i32, %arg1 : i32, i32, i32
  }
  func.func @transform_9(%arg0: i32, %arg1: i32) -> (i32, i32, i32) {
    %c0_i32 = arith.constant 0 : i32
    %c0_i32_0 = arith.constant 0 : i32
    return %arg0, %c0_i32, %arg1 : i32, i32, i32
  }
  func.func @transform_10(%arg0: i32, %arg1: i32) -> (i32, i32, i32) {
    %c0_i32 = arith.constant 0 : i32
    %c0_i32_0 = arith.constant 0 : i32
    return %arg0, %c0_i32, %arg1 : i32, i32, i32
  }
  func.func @transform_11(%arg0: i32, %arg1: i32) -> (i32, i32, i32) {
    %c0_i32 = arith.constant 0 : i32
    %c0_i32_0 = arith.constant 0 : i32
    return %arg0, %c0_i32, %arg1 : i32, i32, i32
  }
}

</mosaic_0001>

<llo_original>
// kernel: tpu_custom_call.1
$region0: #{tpu_custom_call.1}
  #allocation0 [shape = 'u32[]', space=smem, size = 0x4, offset = 0x4, fixed_abs, tag = 'smem constant byte address 0x4 - core index']
  #allocation1 [shape = 'u32[144,128]{1,0:T(1,128)}', space=vmem, size = 0x12000, scoped, tag = 'internal scratch']
  %s0 = inlined_call_operand.vmem [shape: f32[2,32,128], index: 0, kind: input, shape index: {}]
  %s1 = inlined_call_operand.vmem [shape: bf16[8,32], index: 1, kind: input, shape index: {}]
  %s2 = inlined_call_operand.vmem [shape: f32[8,1], index: 2, kind: input, shape index: {}]
  %s3 = inlined_call_operand.vmem [shape: bf16[64,8], index: 3, kind: input, shape index: {}]
  %s4 = inlined_call_operand.vmem [shape: bf16[8,64], index: 4, kind: input, shape index: {}]
  %s5 = inlined_call_operand.vmem [shape: bf16[8,64], index: 5, kind: input, shape index: {}]
  %s6 = inlined_call_operand.vmem [shape: bf16[32,8], index: 6, kind: input, shape index: {}]
  %s7 = inlined_call_operand.vmem [shape: f32[32,1], index: 7, kind: input, shape index: {}]
  %s8 = inlined_call_operand.hbm [shape: f32[2,32,128], index: 8, kind: output, shape index: {0}]
  %s9 = inlined_call_operand.hbm [shape: f32[2,8,128], index: 9, kind: output, shape index: {1}]
  %s10 = inlined_call_operand.hbm [shape: f32[2,8,128], index: 10, kind: output, shape index: {2}]
  %s11 = inlined_call_operand.hbm [shape: s32[2,1,128], index: 11, kind: output, shape index: {3}]
  %12 = xla_tuple %s8, %s9, %s10, %s11
  %s13 = sld [smem:[#allocation0]]
  $region89: #{tpu_custom_call.1} parent=0
    _
  %s15 = ssub.s32 1, %s13
  %s16 = scalar_select 0, %s15, %s13
  $region1: #{tpu_custom_call.1} parent=0
    #allocation2 [shape = 'u8[32768]{0}', space=vmem, size = 0x8000, scoped, tag = 'output window, operand 0']
    #allocation3 [shape = 's32[2]{0}', space=sflag, size = 0x8, scoped, tag = 'scoped memory for tpu_custom_call.1']
    #allocation4 [shape = 'u8[8192]{0}', space=vmem, size = 0x2000, scoped, tag = 'output window, operand 1']
    #allocation5 [shape = 's32[2]{0}', space=sflag, size = 0x8, scoped, tag = 'scoped memory for tpu_custom_call.1']
    #allocation6 [shape = 'u8[8192]{0}', space=vmem, size = 0x2000, scoped, tag = 'output window, operand 2']
    #allocation7 [shape = 'u8[1024]{0}', space=vmem, size = 0x400, scoped, tag = 'output window, operand 3']
    #allocation8 [shape = 's32[2]{0}', space=sflag, size = 0x8, scoped, tag = 'scoped memory for tpu_custom_call.1']
    %17 = vsyncpa [#allocation3], 0
    %s18 = scalar_lea.sflag [#allocation3], 1
    %19 = vsyncpa %s18, 0
    %20 = vsyncpa [#allocation5], 0
    %s21 = scalar_lea.sflag [#allocation5], 1
    %22 = vsyncpa %s21, 0
    %23 = vsyncpa [#allocation8], 0
    %s24 = scalar_lea.sflag [#allocation8], 1
    %25 = vsyncpa %s24, 0
    loop: start=0, step=1, limit=4
    $region2: #{tpu_custom_call.1} parent=1 // loop_pre_header
      _
    $region3: #{tpu_custom_call.1} parent=1 // loop_header
      %s27 = sphi 0, %s31
      %p28 = scmp.ge.s32.totalorder %s27, 4
      %s34 = sphi 0, %s46
      %s35 = sphi 0, %s42
      %s36 = sphi 0, %s34
      %s37 = sphi 0, %s35
      %s38 = sphi 0, %s36
      %s39 = sphi 0, %s37
      %s51 = sphi 0, %s53
      %s54 = sphi 0, %s51
      %s55 = sphi 0, %s54
      %s71 = sphi 0, %s55
      %s75 = sphi 0, %s75
      %s77 = sphi 0, %s75
      %s78 = sphi 0, %s77
      %s92 = sphi 0, %s78
      %s96 = sphi 0, %s96
      %s98 = sphi 0, %s96
      %s99 = sphi 0, %s98
      %s113 = sphi 0, %s99
      %s117 = sphi 0, %s117
      %s119 = sphi 0, %s117
      %s120 = sphi 0, %s119
      %s134 = sphi 0, %s120
      %s138 = sphi 0, %s138
      %s140 = sphi 0, %s138
      %s141 = sphi 0, %s140
      %s155 = sphi 0, %s141
      %s159 = sphi 0, %s159
      %s161 = sphi 0, %s159
      %s162 = sphi 0, %s161
      %s176 = sphi 0, %s162
      %s180 = sphi 0, %s180
      %s182 = sphi 0, %s180
      %s183 = sphi 0, %s182
      %s197 = sphi 0, %s183
      %s201 = sphi 0, %s201
      %s203 = sphi 0, %s201
      %s204 = sphi 0, %s203
      %s218 = sphi 0, %s204
      %s226 = sphi 0, %s228
      %s229 = sphi 0, %s226
      %s230 = sphi 0, %s229
      %s246 = sphi 0, %s230
      %s254 = sphi 0, %s256
      %s257 = sphi 0, %s254
      %s258 = sphi 0, %s257
      %s274 = sphi 0, %s258
      %s282 = sphi 0, %s284
      %s285 = sphi 0, %s282
      %s286 = sphi 0, %s285
      %s302 = sphi 0, %s286
      %s310 = sphi 0, %s312
      %s313 = sphi 0, %s310
      %s314 = sphi 0, %s313
      %s330 = sphi 0, %s314
    $region4: #{tpu_custom_call.1} parent=1 // loop_header_branch
      %30 = sbr.rel (%p28) target = $region8
    $region5: #{tpu_custom_call.1} parent=1 // loop_body
      %s32 = ssub.s32 %s27, 1
      %s33 = ssub.s32 %s27, 2
      %s40 = sadd.s32 1, %s35
      %p41 = scmp.ge.s32.totalorder %s40, 1
      %s42 = scalar_select %p41, 0, %s40
      %s43 = sadd.s32 1, %s34
      %s44 = scalar_select %p41, %s43, %s34
      %p45 = scmp.ge.s32.totalorder %s44, 2
      %s46 = scalar_select %p45, 0, %s44
      %s47 = ssub.s32 %s34, %s46
      %s48 = ssub.s32 %s35, %s42
      %s49 = sor.u32 %s47, %s48
      %p50 = scmp.eq.s32.totalorder %s49, 0
      %s52 = sadd.s32 %s51, 1
      %s53 = scalar_select %p50, %s51, %s52
      %p56 = pneg %p50
      %p57 = scmp.eq.s32.totalorder %s27, 1
      %p58 = por %p56, %p57
      %p59 = scmp.ne.s32.totalorder %s51, %s54
      %p60 = scmp.eq.s32.totalorder %s27, 0
      %p61 = por %p59, %p60
      %p62 = scmp.ne.s32.totalorder %s51, %s54
      %p63 = scmp.eq.s32.totalorder %s32, 1
      %p64 = por %p62, %p63
      %p65 = scmp.ne.s32.totalorder %s54, %s55
      %p66 = scmp.eq.s32.totalorder %s32, 0
      %p67 = por %p65, %p66
      %p68 = scmp.ne.s32.totalorder %s54, %s55
      %p69 = scmp.eq.s32.totalorder %s33, 1
      %p70 = por %p68, %p69
      %p72 = scmp.ne.s32.totalorder %s55, %s71
      %p73 = scmp.eq.s32.totalorder %s33, 0
      %p74 = por %p72, %p73
      %s76 = sadd.s32 %s75, 1
      %p79 = scmp.eq.s32.totalorder %s27, 1
      %p80 = scmp.ne.s32.totalorder %s75, %s77
      %p81 = scmp.eq.s32.totalorder %s27, 0
      %p82 = por %p80, %p81
      %p83 = scmp.ne.s32.totalorder %s75, %s77
      %p84 = scmp.eq.s32.totalorder %s32, 1
      %p85 = por %p83, %p84
      %p86 = scmp.ne.s32.totalorder %s77, %s78
      %p87 = scmp.eq.s32.totalorder %s32, 0
      %p88 = por %p86, %p87
      %p89 = scmp.ne.s32.totalorder %s77, %s78
      %p90 = scmp.eq.s32.totalorder %s33, 1
      %p91 = por %p89, %p90
      %p93 = scmp.ne.s32.totalorder %s78, %s92
      %p94 = scmp.eq.s32.totalorder %s33, 0
      %p95 = por %p93, %p94
      %s97 = sadd.s32 %s96, 1
      %p100 = scmp.eq.s32.totalorder %s27, 1
      %p101 = scmp.ne.s32.totalorder %s96, %s98
      %p102 = scmp.eq.s32.totalorder %s27, 0
      %p103 = por %p101, %p102
      %p104 = scmp.ne.s32.totalorder %s96, %s98
      %p105 = scmp.eq.s32.totalorder %s32, 1
      %p106 = por %p104, %p105
      %p107 = scmp.ne.s32.totalorder %s98, %s99
      %p108 = scmp.eq.s32.totalorder %s32, 0
      %p109 = por %p107, %p108
      %p110 = scmp.ne.s32.totalorder %s98, %s99
      %p111 = scmp.eq.s32.totalorder %s33, 1
      %p112 = por %p110, %p111
      %p114 = scmp.ne.s32.totalorder %s99, %s113
      %p115 = scmp.eq.s32.totalorder %s33, 0
      %p116 = por %p114, %p115
      %s118 = sadd.s32 %s117, 1
      %p121 = scmp.eq.s32.totalorder %s27, 1
      %p122 = scmp.ne.s32.totalorder %s117, %s119
      %p123 = scmp.eq.s32.totalorder %s27, 0
      %p124 = por %p122, %p123
      %p125 = scmp.ne.s32.totalorder %s117, %s119
      %p126 = scmp.eq.s32.totalorder %s32, 1
      %p127 = por %p125, %p126
      %p128 = scmp.ne.s32.totalorder %s119, %s120
      %p129 = scmp.eq.s32.totalorder %s32, 0
      %p130 = por %p128, %p129
      %p131 = scmp.ne.s32.totalorder %s119, %s120
      %p132 = scmp.eq.s32.totalorder %s33, 1
      %p133 = por %p131, %p132
      %p135 = scmp.ne.s32.totalorder %s120, %s134
      %p136 = scmp.eq.s32.totalorder %s33, 0
      %p137 = por %p135, %p136
      %s139 = sadd.s32 %s138, 1
      %p142 = scmp.eq.s32.totalorder %s27, 1
      %p143 = scmp.ne.s32.totalorder %s138, %s140
      %p144 = scmp.eq.s32.totalorder %s27, 0
      %p145 = por %p143, %p144
      %p146 = scmp.ne.s32.totalorder %s138, %s140
      %p147 = scmp.eq.s32.totalorder %s32, 1
      %p148 = por %p146, %p147
      %p149 = scmp.ne.s32.totalorder %s140, %s141
      %p150 = scmp.eq.s32.totalorder %s32, 0
      %p151 = por %p149, %p150
      %p152 = scmp.ne.s32.totalorder %s140, %s141
      %p153 = scmp.eq.s32.totalorder %s33, 1
      %p154 = por %p152, %p153
      %p156 = scmp.ne.s32.totalorder %s141, %s155
      %p157 = scmp.eq.s32.totalorder %s33, 0
      %p158 = por %p156, %p157
      %s160 = sadd.s32 %s159, 1
      %p163 = scmp.eq.s32.totalorder %s27, 1
      %p164 = scmp.ne.s32.totalorder %s159, %s161
      %p165 = scmp.eq.s32.totalorder %s27, 0
      %p166 = por %p164, %p165
      %p167 = scmp.ne.s32.totalorder %s159, %s161
      %p168 = scmp.eq.s32.totalorder %s32, 1
      %p169 = por %p167, %p168
      %p170 = scmp.ne.s32.totalorder %s161, %s162
      %p171 = scmp.eq.s32.totalorder %s32, 0
      %p172 = por %p170, %p171
      %p173 = scmp.ne.s32.totalorder %s161, %s162
      %p174 = scmp.eq.s32.totalorder %s33, 1
      %p175 = por %p173, %p174
      %p177 = scmp.ne.s32.totalorder %s162, %s176
      %p178 = scmp.eq.s32.totalorder %s33, 0
      %p179 = por %p177, %p178
      %s181 = sadd.s32 %s180, 1
      %p184 = scmp.eq.s32.totalorder %s27, 1
      %p185 = scmp.ne.s32.totalorder %s180, %s182
      %p186 = scmp.eq.s32.totalorder %s27, 0
      %p187 = por %p185, %p186
      %p188 = scmp.ne.s32.totalorder %s180, %s182
      %p189 = scmp.eq.s32.totalorder %s32, 1
      %p190 = por %p188, %p189
      %p191 = scmp.ne.s32.totalorder %s182, %s183
      %p192 = scmp.eq.s32.totalorder %s32, 0
      %p193 = por %p191, %p192
      %p194 = scmp.ne.s32.totalorder %s182, %s183
      %p195 = scmp.eq.s32.totalorder %s33, 1
      %p196 = por %p194, %p195
      %p198 = scmp.ne.s32.totalorder %s183, %s197
      %p199 = scmp.eq.s32.totalorder %s33, 0
      %p200 = por %p198, %p199
      %s202 = sadd.s32 %s201, 1
      %p205 = scmp.eq.s32.totalorder %s27, 1
      %p206 = scmp.ne.s32.totalorder %s201, %s203
      %p207 = scmp.eq.s32.totalorder %s27, 0
      %p208 = por %p206, %p207
      %p209 = scmp.ne.s32.totalorder %s201, %s203
      %p210 = scmp.eq.s32.totalorder %s32, 1
      %p211 = por %p209, %p210
      %p212 = scmp.ne.s32.totalorder %s203, %s204
      %p213 = scmp.eq.s32.totalorder %s32, 0
      %p214 = por %p212, %p213
      %p215 = scmp.ne.s32.totalorder %s203, %s204
      %p216 = scmp.eq.s32.totalorder %s33, 1
      %p217 = por %p215, %p216
      %p219 = scmp.ne.s32.totalorder %s204, %s218
      %p220 = scmp.eq.s32.totalorder %s33, 0
      %p221 = por %p219, %p220
      %s222 = ssub.s32 %s34, %s46
      %s223 = ssub.s32 %s35, %s42
      %s224 = sor.u32 %s222, %s223
      %p225 = scmp.eq.s32.totalorder %s224, 0
      %s227 = sadd.s32 %s226, 1
      %s228 = scalar_select %p225, %s226, %s227
      %p231 = pneg %p225
      %p232 = scmp.eq.s32.totalorder %s27, 1
      %p233 = por %p231, %p232
      %p234 = scmp.ne.s32.totalorder %s226, %s229
      %p235 = scmp.eq.s32.totalorder %s27, 0
      %p236 = por %p234, %p235
      %p237 = scmp.ne.s32.totalorder %s226, %s229
      %p238 = scmp.eq.s32.totalorder %s32, 1
      %p239 = por %p237, %p238
      %p240 = scmp.ne.s32.totalorder %s229, %s230
      %p241 = scmp.eq.s32.totalorder %s32, 0
      %p242 = por %p240, %p241
      %p243 = scmp.ne.s32.totalorder %s229, %s230
      %p244 = scmp.eq.s32.totalorder %s33, 1
      %p245 = por %p243, %p244
      %p247 = scmp.ne.s32.totalorder %s230, %s246
      %p248 = scmp.eq.s32.totalorder %s33, 0
      %p249 = por %p247, %p248
      %s250 = ssub.s32 %s34, %s46
      %s251 = ssub.s32 %s35, %s42
      %s252 = sor.u32 %s250, %s251
      %p253 = scmp.eq.s32.totalorder %s252, 0
      %s255 = sadd.s32 %s254, 1
      %s256 = scalar_select %p253, %s254, %s255
      %p259 = pneg %p253
      %p260 = scmp.eq.s32.totalorder %s27, 1
      %p261 = por %p259, %p260
      %p262 = scmp.ne.s32.totalorder %s254, %s257
      %p263 = scmp.eq.s32.totalorder %s27, 0
      %p264 = por %p262, %p263
      %p265 = scmp.ne.s32.totalorder %s254, %s257
      %p266 = scmp.eq.s32.totalorder %s32, 1
      %p267 = por %p265, %p266
      %p268 = scmp.ne.s32.totalorder %s257, %s258
      %p269 = scmp.eq.s32.totalorder %s32, 0
      %p270 = por %p268, %p269
      %p271 = scmp.ne.s32.totalorder %s257, %s258
      %p272 = scmp.eq.s32.totalorder %s33, 1
      %p273 = por %p271, %p272
      %p275 = scmp.ne.s32.totalorder %s258, %s274
      %p276 = scmp.eq.s32.totalorder %s33, 0
      %p277 = por %p275, %p276
      %s278 = ssub.s32 %s34, %s46
      %s279 = ssub.s32 %s35, %s42
      %s280 = sor.u32 %s278, %s279
      %p281 = scmp.eq.s32.totalorder %s280, 0
      %s283 = sadd.s32 %s282, 1
      %s284 = scalar_select %p281, %s282, %s283
      %p287 = pneg %p281
      %p288 = scmp.eq.s32.totalorder %s27, 1
      %p289 = por %p287, %p288
      %p290 = scmp.ne.s32.totalorder %s282, %s285
      %p291 = scmp.eq.s32.totalorder %s27, 0
      %p292 = por %p290, %p291
      %p293 = scmp.ne.s32.totalorder %s282, %s285
      %p294 = scmp.eq.s32.totalorder %s32, 1
      %p295 = por %p293, %p294
      %p296 = scmp.ne.s32.totalorder %s285, %s286
      %p297 = scmp.eq.s32.totalorder %s32, 0
      %p298 = por %p296, %p297
      %p299 = scmp.ne.s32.totalorder %s285, %s286
      %p300 = scmp.eq.s32.totalorder %s33, 1
      %p301 = por %p299, %p300
      %p303 = scmp.ne.s32.totalorder %s286, %s302
      %p304 = scmp.eq.s32.totalorder %s33, 0
      %p305 = por %p303, %p304
      %s306 = ssub.s32 %s34, %s46
      %s307 = ssub.s32 %s35, %s42
      %s308 = sor.u32 %s306, %s307
      %p309 = scmp.eq.s32.totalorder %s308, 0
      %s311 = sadd.s32 %s310, 1
      %s312 = scalar_select %p309, %s310, %s311
      %p315 = pneg %p309
      %p316 = scmp.eq.s32.totalorder %s27, 1
      %p317 = por %p315, %p316
      %p318 = scmp.ne.s32.totalorder %s310, %s313
      %p319 = scmp.eq.s32.totalorder %s27, 0
      %p320 = por %p318, %p319
      %p321 = scmp.ne.s32.totalorder %s310, %s313
      %p322 = scmp.eq.s32.totalorder %s32, 1
      %p323 = por %p321, %p322
      %p324 = scmp.ne.s32.totalorder %s313, %s314
      %p325 = scmp.eq.s32.totalorder %s32, 0
      %p326 = por %p324, %p325
      %p327 = scmp.ne.s32.totalorder %s313, %s314
      %p328 = scmp.eq.s32.totalorder %s33, 1
      %p329 = por %p327, %p328
      %p331 = scmp.ne.s32.totalorder %s314, %s330
      %p332 = scmp.eq.s32.totalorder %s33, 0
      %p333 = por %p331, %p332
      %p334 = scmp.le.s32.totalorder 1, %s27
      %p335 = scmp.lt.s32.totalorder %s27, 3
      %p336 = pnand %p334, %p335
      %p337 = pneg %p336
      // Predicated region
      $region9: #{tpu_custom_call.1} parent=5 // pred_check
        _
      $region10: #{tpu_custom_call.1} parent=5 // pred_check_branch
        %339 = sbr.rel (%p336) target = $region12
      $region11: #{tpu_custom_call.1} parent=5 // pred_region
        %s340 = ssub.s32 %s27, 1
        // Predicated region
        $region13: #{tpu_custom_call.1} parent=11 // pred_check
          %p341 = pneg %p88
        $region14: #{tpu_custom_call.1} parent=11 // pred_check_branch
          %343 = sbr.rel (%p341) target = $region16
        $region15: #{tpu_custom_call.1} parent=11 // pred_region
          _
        $region16: #{tpu_custom_call.1} parent=11 // pred_fallthru
          _
        // Predicated region
        $region17: #{tpu_custom_call.1} parent=11 // pred_check
          %p344 = pneg %p109
        $region18: #{tpu_custom_call.1} parent=11 // pred_check_branch
          %346 = sbr.rel (%p344) target = $region20
        $region19: #{tpu_custom_call.1} parent=11 // pred_region
          _
        $region20: #{tpu_custom_call.1} parent=11 // pred_fallthru
          _
        // Predicated region
        $region21: #{tpu_custom_call.1} parent=11 // pred_check
          %p347 = pneg %p130
        $region22: #{tpu_custom_call.1} parent=11 // pred_check_branch
          %349 = sbr.rel (%p347) target = $region24
        $region23: #{tpu_custom_call.1} parent=11 // pred_region
          _
        $region24: #{tpu_custom_call.1} parent=11 // pred_fallthru
          _
        // Predicated region
        $region25: #{tpu_custom_call.1} parent=11 // pred_check
          %p350 = pneg %p151
        $region26: #{tpu_custom_call.1} parent=11 // pred_check_branch
          %352 = sbr.rel (%p350) target = $region28
        $region27: #{tpu_custom_call.1} parent=11 // pred_region
          _
        $region28: #{tpu_custom_call.1} parent=11 // pred_fallthru
          _
        // Predicated region
        $region29: #{tpu_custom_call.1} parent=11 // pred_check
          %p353 = pneg %p172
        $region30: #{tpu_custom_call.1} parent=11 // pred_check_branch
          %355 = sbr.rel (%p353) target = $region32
        $region31: #{tpu_custom_call.1} parent=11 // pred_region
          _
        $region32: #{tpu_custom_call.1} parent=11 // pred_fallthru
          _
        // Predicated region
        $region33: #{tpu_custom_call.1} parent=11 // pred_check
          %p356 = pneg %p193
        $region34: #{tpu_custom_call.1} parent=11 // pred_check_branch
          %358 = sbr.rel (%p356) target = $region36
        $region35: #{tpu_custom_call.1} parent=11 // pred_region
          _
        $region36: #{tpu_custom_call.1} parent=11 // pred_fallthru
          _
        // Predicated region
        $region37: #{tpu_custom_call.1} parent=11 // pred_check
          %p359 = pneg %p214
        $region38: #{tpu_custom_call.1} parent=11 // pred_check_branch
          %361 = sbr.rel (%p359) target = $region40
        $region39: #{tpu_custom_call.1} parent=11 // pred_region
          _
        $region40: #{tpu_custom_call.1} parent=11 // pred_fallthru
          _
      $region12: #{tpu_custom_call.1} parent=5 // pred_fallthru
        _
      %p362 = scmp.lt.s32.totalorder %s27, 2
      // Predicated region
      $region41: #{tpu_custom_call.1} parent=5 // pred_check
        %p363 = pneg %p362
      $region42: #{tpu_custom_call.1} parent=5 // pred_check_branch
        %365 = sbr.rel (%p363) target = $region44
      $region43: #{tpu_custom_call.1} parent=5 // pred_region
        // Predicated region
        $region45: #{tpu_custom_call.1} parent=43 // pred_check
          %p366 = pneg %p61
        $region46: #{tpu_custom_call.1} parent=43 // pred_check_branch
          %368 = sbr.rel (%p366) target = $region48
        $region47: #{tpu_custom_call.1} parent=43 // pred_region
          %p369 = scmp.lt.s32.totalorder %s34, 1
          %s370 = scalar_select %p369, %s34, 1
          %p371 = scmp.lt.s32.totalorder %s35, 0
          %s372 = scalar_select %p371, %s35, 0
          %s373 = smul.addr %s370, 4
          %s374 = sadd.s32 %s372, %s373
          %s375 = smul.addr %s374, 8
          %s376 = scalar_lea.vmem %s0, %s375
        $region48: #{tpu_custom_call.1} parent=43 // pred_fallthru
          _
      $region44: #{tpu_custom_call.1} parent=5 // pred_fallthru
        _
      %p377 = scmp.le.s32.totalorder 1, %s27
      %p378 = scmp.lt.s32.totalorder %s27, 3
      %p379 = pnand %p377, %p378
      %p380 = pneg %p379
      // Predicated region
      $region49: #{tpu_custom_call.1} parent=5 // pred_check
        _
      $region50: #{tpu_custom_call.1} parent=5 // pred_check_branch
        %382 = sbr.rel (%p379) target = $region52
      $region51: #{tpu_custom_call.1} parent=5 // pred_region
        %s383 = ssub.s32 %s27, 1
        %p384 = scmp.lt.s32.totalorder %s36, 1
        %s385 = scalar_select %p384, %s36, 1
        %p386 = scmp.lt.s32.totalorder %s37, 0
        %s387 = scalar_select %p386, %s37, 0
        %s388 = smul.addr %s385, 4
        %s389 = sadd.s32 %s387, %s388
        %s390 = smul.addr %s389, 8
        %s391 = scalar_lea.vmem %s0, %s390
        %p392 = pneg %p67
        %p393 = pneg %p64
        %p394 = pneg %p88
        %p395 = pneg %p85
        %p396 = pneg %p109
        %p397 = pneg %p106
        %p398 = pneg %p130
        %p399 = pneg %p127
        %p400 = pneg %p151
        %p401 = pneg %p148
        %p402 = pneg %p172
        %p403 = pneg %p169
        %p404 = pneg %p193
        %p405 = pneg %p190
        %p406 = pneg %p214
        %p407 = pneg %p211
        %p408 = pneg %p242
        %p409 = pneg %p239
        %s410 = sand.u32 %s229, 1
        %s411 = scalar_lea.sflag [#allocation3], %s410
        %s412 = sand.u32 %s229, 1
        %s413 = smul.addr %s412, 32
        %s414 = scalar_lea.vmem [#allocation2], %s413
        %p415 = pneg %p270
        %p416 = pneg %p267
        %s417 = sand.u32 %s32, 1
        %s418 = scalar_lea.sflag [#allocation5], %s417
        %s419 = sand.u32 %s257, 1
        %s420 = smul.addr %s419, 8
        %s421 = scalar_lea.vmem [#allocation4], %s420
        %p422 = pneg %p298
        %p423 = pneg %p295
        %s424 = sand.u32 %s32, 1
        %s425 = scalar_lea.sflag [#allocation5], %s424
        %s426 = sand.u32 %s285, 1
        %s427 = smul.addr %s426, 8
        %s428 = scalar_lea.vmem [#allocation6], %s427
        %p429 = pneg %p326
        %p430 = pneg %p323
        %s431 = sand.u32 %s313, 1
        %s432 = scalar_lea.sflag [#allocation8], %s431
        %s433 = sand.u32 %s313, 1
        %s434 = scalar_lea.vmem [#allocation7], %s433
        %p435 = scmp.lt.s32.totalorder %s36, 1
        %s436 = scalar_select %p435, %s36, 1
        %p437 = scmp.lt.s32.totalorder %s37, 0
        %s438 = scalar_select %p437, %s37, 0
        %s439 = smul.addr %s436, 4
        %s440 = sadd.s32 %s438, %s439
        %s441 = smul.addr %s440, 8
        %s442 = scalar_lea.vmem %s0, %s441
        %v444 = vld [vmem:[%s442] sm:$0xff]
        %v445 = vld [vmem:[%s442 + $0x8] sm:$0xff]
        %v446 = vld [vmem:[%s442 + $0x10] sm:$0xff]
        %v447 = vld [vmem:[%s442 + $0x18] sm:$0xff]
        %v448 = vpack.c.bf16 %v445, %v444
        %v449 = vpack.c.bf16 %v447, %v446
        %v450 = vld [vmem:[%s1] sm:$0xf]
        %v451 = vld [vmem:[%s2] sm:$0xff]
        %453 = vset.pattern.permute.xlu0 0
        %454 = vperm.xlu0 %453, %v451
        %v455 = vpop.permute.xlu0 %454
        %vm457 = vcmask 261120
        %v459 = vsel %vm457, %v450, 0
        %461 = vmatprep.subr.bf16.mxu0 0
        %462 = vmatpush1.bf16.msra.mxu0 0
        %463 = vmatprep.subr.bf16.mxu0 0
        %464 = vmatpush1.bf16.msra.mxu0 0
        %465 = vmatprep.subr.bf16.mxu0 0
        %466 = vmatpush1.bf16.msra.mxu0 0
        %467 = vmatprep.subr.bf16.mxu0 0
        %468 = vmatpush1.bf16.msra.mxu0 0
        %469 = vmatprep.subr.bf16.mxu0 0
        %470 = vmatpush1.bf16.msra.mxu0 0
        %471 = vmatprep.subr.bf16.mxu0 0
        %472 = vmatpush1.bf16.msra.mxu0 0
        %473 = vmatprep.subr.bf16.mxu0 0
        %474 = vmatpush1.bf16.msra.mxu0 %v449
        %475 = vmatprep.subr.bf16.mxu0 0
        %476 = vmatpush1.bf16.msra.mxu0 %v448
        %477 = vmatprep.subr.bf16.mxu0 0
        %478 = vmatpush2.bf16.msra.mxu0 0
        %479 = vmatprep.subr.bf16.mxu0 0
        %480 = vmatpush2.bf16.msra.mxu0 0
        %481 = vmatprep.subr.bf16.mxu0 0
        %482 = vmatpush2.bf16.msra.mxu0 0
        %483 = vmatprep.subr.bf16.mxu0 0
        %484 = vmatpush2.bf16.msra.mxu0 0
        %485 = vmatprep.subr.bf16.mxu0 0
        %486 = vmatpush2.bf16.msra.mxu0 0
        %487 = vmatprep.subr.bf16.mxu0 0
        %488 = vmatpush2.bf16.msra.mxu0 0
        %489 = vmatprep.subr.bf16.mxu0 0
        %490 = vmatpush2.bf16.msra.mxu0 0
        %491 = vmatprep.subr.bf16.mxu0 0
        %492 = vmatpush2.bf16.msra.mxu0 0
        %493 = vmatprep.mubr.bf16.mxu0 0
        %494 = vmatmul.mubr.bf16.gmra.mxu0 %v459
        %v495 = vpop.f32.mrf.mxu0
        %v496 = vadd.f32 %v455, %v495
        %v497 = vpop.f32.mrf.mxu0
        %v498 = vpop.f32.mrf.mxu0
        %v499 = vpop.f32.mrf.mxu0
        %500 = vdwg.mxu0
        %501 = vst [vmem:[%s421] sm:$0xff] %v496
        %v502 = vmul.f32 %v496, %v496
        %v503 = vrot.slane %v502, 4
        %v504 = vadd.f32 %v502, %v503
        %v505 = vrot.slane %v504, 2
        %v506 = vadd.f32 %v504, %v505
        %v507 = vrot.slane %v506, 1
        %v508 = vadd.f32 %v506, %v507
        %v509 = vmax.f32 %v508, 1e-24
        %v510 = vrsqrt.pop %v509
        %v511 = vmul.f32 %v496, %v510
        %v512 = vpack.c.bf16 %v511, %v511
        %v513 = vld [vmem:[%s3] sm:$0xf]
        %v514 = vld [vmem:[%s3 + $0x4] sm:$0xf]
        %v515 = vld [vmem:[%s3 + $0x8] sm:$0xf]
        %v516 = vld [vmem:[%s3 + $0xc] sm:$0xf]
        %v517 = vld [vmem:[%s3 + $0x10] sm:$0xf]
        %v518 = vld [vmem:[%s3 + $0x14] sm:$0xf]
        %v519 = vld [vmem:[%s3 + $0x18] sm:$0xf]
        %v520 = vld [vmem:[%s3 + $0x1c] sm:$0xf]
        %v529 = vunpack.c.l.b16 %v513
        %v530 = vunpack.c.l.b16 %v514
        %v531 = vunpack.c.l.b16 %v515
        %v532 = vunpack.c.l.b16 %v516
        %v533 = vunpack.c.l.b16 %v517
        %v534 = vunpack.c.l.b16 %v518
        %v535 = vunpack.c.l.b16 %v519
        %v536 = vunpack.c.l.b16 %v520
        %v537 = vpack.c.b16 %v530, %v529
        %v538 = vpack.c.b16 %v532, %v531
        %v539 = vpack.c.b16 %v534, %v533
        %v540 = vpack.c.b16 %v536, %v535
        %vm541 = vcmask 64512
        %v543 = vsel %vm541, %v537, 0
        %v546 = vsel %vm541, %v538, 0
        %v549 = vsel %vm541, %v539, 0
        %v552 = vsel %vm541, %v540, 0
        %vm554 = vcmask 1043456
        %v556 = vsel %vm554, %v512, 0
        %558 = vmatprep.subr.bf16.mxu0 0
        %559 = vmatpush1.bf16.msra.mxu0 0
        %560 = vmatprep.subr.bf16.mxu0 0
        %561 = vmatpush1.bf16.msra.mxu0 0
        %562 = vmatprep.subr.bf16.mxu0 0
        %563 = vmatpush1.bf16.msra.mxu0 0
        %564 = vmatprep.subr.bf16.mxu0 0
        %565 = vmatpush1.bf16.msra.mxu0 0
        %566 = vmatprep.subr.bf16.mxu0 0
        %567 = vmatpush1.bf16.msra.mxu0 0
        %568 = vmatprep.subr.bf16.mxu0 0
        %569 = vmatpush1.bf16.msra.mxu0 0
        %570 = vmatprep.subr.bf16.mxu0 0
        %571 = vmatpush1.bf16.msra.mxu0 0
        %572 = vmatprep.subr.bf16.mxu0 0
        %573 = vmatpush1.bf16.msra.mxu0 %v556
        %574 = vmatprep.subr.bf16.mxu0 0
        %575 = vmatpush2.bf16.msra.mxu0 0
        %576 = vmatprep.subr.bf16.mxu0 0
        %577 = vmatpush2.bf16.msra.mxu0 0
        %578 = vmatprep.subr.bf16.mxu0 0
        %579 = vmatpush2.bf16.msra.mxu0 0
        %580 = vmatprep.subr.bf16.mxu0 0
        %581 = vmatpush2.bf16.msra.mxu0 0
        %582 = vmatprep.subr.bf16.mxu0 0
        %583 = vmatpush2.bf16.msra.mxu0 0
        %584 = vmatprep.subr.bf16.mxu0 0
        %585 = vmatpush2.bf16.msra.mxu0 0
        %586 = vmatprep.subr.bf16.mxu0 0
        %587 = vmatpush2.bf16.msra.mxu0 0
        %588 = vmatprep.subr.bf16.mxu0 0
        %589 = vmatpush2.bf16.msra.mxu0 0
        %590 = vmatprep.mubr.bf16.mxu0 0
        %591 = vmatmul.mubr.bf16.gmra.mxu0 %v543
        %v592 = vpop.f32.mrf.mxu0
        %v593 = vadd.f32 0.0, %v592
        %v594 = vpop.f32.mrf.mxu0
        %v595 = vpop.f32.mrf.mxu0
        %v596 = vadd.f32 0.0, %v595
        %v597 = vpop.f32.mrf.mxu0
        %598 = vmatprep.mubr.bf16.mxu0 0
        %599 = vmatmul.mubr.bf16.gmra.mxu0 %v546
        %v600 = vpop.f32.mrf.mxu0
        %v601 = vadd.f32 0.0, %v600
        %v602 = vpop.f32.mrf.mxu0
        %v603 = vpop.f32.mrf.mxu0
        %v604 = vadd.f32 0.0, %v603
        %v605 = vpop.f32.mrf.mxu0
        %606 = vmatprep.mubr.bf16.mxu0 0
        %607 = vmatmul.mubr.bf16.gmra.mxu0 %v549
        %v608 = vpop.f32.mrf.mxu0
        %v609 = vadd.f32 0.0, %v608
        %v610 = vpop.f32.mrf.mxu0
        %v611 = vpop.f32.mrf.mxu0
        %v612 = vadd.f32 0.0, %v611
        %v613 = vpop.f32.mrf.mxu0
        %614 = vmatprep.mubr.bf16.mxu0 0
        %615 = vmatmul.mubr.bf16.gmra.mxu0 %v552
        %v616 = vpop.f32.mrf.mxu0
        %v617 = vadd.f32 0.0, %v616
        %v618 = vpop.f32.mrf.mxu0
        %v619 = vpop.f32.mrf.mxu0
        %v620 = vadd.f32 0.0, %v619
        %v621 = vpop.f32.mrf.mxu0
        %622 = vdwg.mxu0
        %v623 = vmax.f32 %v593, %v609
        %v624 = vmax.f32 %v596, %v612
        %v625 = vmax.f32 %v601, %v617
        %v626 = vmax.f32 %v604, %v620
        %v627 = vmax.f32 %v623, %v624
        %v628 = vmax.f32 %v625, %v626
        %v629 = vmax.f32 %v627, %v628
        %v630 = vrot.slane %v629, 4
        %v631 = vmax.f32 %v629, %v630
        %v632 = vrot.slane %v631, 2
        %v633 = vmax.f32 %v631, %v632
        %v634 = vrot.slane %v633, 1
        %v635 = vmax.f32 %v633, %v634
        %v636 = vlaneseq
        %v637 = vshrl.u32 %v636, 7
        %v638 = vadd.s32 %v637, 8
        %v639 = vadd.s32 %v637, 16
        %v640 = vadd.s32 %v637, 24
        %v641 = vadd.s32 %v637, 32
        %v642 = vadd.s32 %v637, 40
        %v643 = vadd.s32 %v637, 48
        %v644 = vadd.s32 %v637, 56
        %vm645 = vcmp.eq.f32.partialorder %v593, %v635
        %vm646 = vcmp.eq.f32.partialorder %v596, %v635
        %vm647 = vcmp.eq.f32.partialorder %v601, %v635
        %vm648 = vcmp.eq.f32.partialorder %v604, %v635
        %vm649 = vcmp.eq.f32.partialorder %v609, %v635
        %vm650 = vcmp.eq.f32.partialorder %v612, %v635
        %vm651 = vcmp.eq.f32.partialorder %v617, %v635
        %vm652 = vcmp.eq.f32.partialorder %v620, %v635
        %v653 = vsel %vm645, %v637, 64
        %v654 = vsel %vm646, %v638, 64
        %v655 = vsel %vm647, %v639, 64
        %v656 = vsel %vm648, %v640, 64
        %v657 = vsel %vm649, %v641, 64
        %v658 = vsel %vm650, %v642, 64
        %v659 = vsel %vm651, %v643, 64
        %v660 = vsel %vm652, %v644, 64
        %vm661 = vcmp.lt.s32.totalorder %v653, %v657
        %v662 = vsel %vm661, %v653, %v657
        %vm663 = vcmp.lt.s32.totalorder %v654, %v658
        %v664 = vsel %vm663, %v654, %v658
        %vm665 = vcmp.lt.s32.totalorder %v655, %v659
        %v666 = vsel %vm665, %v655, %v659
        %vm667 = vcmp.lt.s32.totalorder %v656, %v660
        %v668 = vsel %vm667, %v656, %v660
        %vm669 = vcmp.lt.s32.totalorder %v662, %v664
        %v670 = vsel %vm669, %v662, %v664
        %vm671 = vcmp.lt.s32.totalorder %v666, %v668
        %v672 = vsel %vm671, %v666, %v668
        %vm673 = vcmp.lt.s32.totalorder %v670, %v672
        %v674 = vsel %vm673, %v670, %v672
        %v675 = vrot.slane %v674, 4
        %vm676 = vcmp.lt.s32.totalorder %v674, %v675
        %v677 = vsel %vm676, %v674, %v675
        %v678 = vrot.slane %v677, 2
        %vm679 = vcmp.lt.s32.totalorder %v677, %v678
        %v680 = vsel %vm679, %v677, %v678
        %v681 = vrot.slane %v680, 1
        %vm682 = vcmp.lt.s32.totalorder %v680, %v681
        %v683 = vsel %vm682, %v680, %v681
        %684 = vst [vmem:[%s434] sm:$0x1] %v683
        %vm685 = vcmp.eq.s32.totalorder %v637, %v683
        %vm686 = vcmp.eq.s32.totalorder %v638, %v683
        %vm687 = vcmp.eq.s32.totalorder %v639, %v683
        %vm688 = vcmp.eq.s32.totalorder %v640, %v683
        %vm689 = vcmp.eq.s32.totalorder %v641, %v683
        %vm690 = vcmp.eq.s32.totalorder %v642, %v683
        %vm691 = vcmp.eq.s32.totalorder %v643, %v683
        %vm692 = vcmp.eq.s32.totalorder %v644, %v683
        %v693 = vsel %vm685, 1, 0
        %v694 = vsel %vm686, 1, 0
        %v695 = vsel %vm687, 1, 0
        %v696 = vsel %vm688, 1, 0
        %v697 = vsel %vm689, 1, 0
        %v698 = vsel %vm690, 1, 0
        %v699 = vsel %vm691, 1, 0
        %v700 = vsel %vm692, 1, 0
        %v701 = vcvt.s32.f32 %v693
        %v702 = vcvt.s32.f32 %v694
        %v703 = vcvt.s32.f32 %v695
        %v704 = vcvt.s32.f32 %v696
        %v705 = vcvt.s32.f32 %v697
        %v706 = vcvt.s32.f32 %v698
        %v707 = vcvt.s32.f32 %v699
        %v708 = vcvt.s32.f32 %v700
        %v709 = vpack.c.bf16 %v702, %v701
        %v710 = vpack.c.bf16 %v704, %v703
        %v711 = vpack.c.bf16 %v706, %v705
        %v712 = vpack.c.bf16 %v708, %v707
        %v713 = vld [vmem:[%s4] sm:$0xf]
        %v714 = vld [vmem:[%s5] sm:$0xf]
        %vm715 = vcmask 523264
        %v717 = vsel %vm715, %v714, 0
        %719 = vmatprep.subr.bf16.mxu0 0
        %720 = vmatpush1.bf16.msra.mxu0 0
        %721 = vmatprep.subr.bf16.mxu0 0
        %722 = vmatpush1.bf16.msra.mxu0 0
        %723 = vmatprep.subr.bf16.mxu0 0
        %724 = vmatpush1.bf16.msra.mxu0 0
        %725 = vmatprep.subr.bf16.mxu0 0
        %726 = vmatpush1.bf16.msra.mxu0 0
        %727 = vmatprep.subr.bf16.mxu0 0
        %728 = vmatpush1.bf16.msra.mxu0 %v712
        %729 = vmatprep.subr.bf16.mxu0 0
        %730 = vmatpush1.bf16.msra.mxu0 %v711
        %731 = vmatprep.subr.bf16.mxu0 0
        %732 = vmatpush1.bf16.msra.mxu0 %v710
        %733 = vmatprep.subr.bf16.mxu0 0
        %734 = vmatpush1.bf16.msra.mxu0 %v709
        %735 = vmatprep.subr.bf16.mxu0 0
        %736 = vmatpush2.bf16.msra.mxu0 0
        %737 = vmatprep.subr.bf16.mxu0 0
        %738 = vmatpush2.bf16.msra.mxu0 0
        %739 = vmatprep.subr.bf16.mxu0 0
        %740 = vmatpush2.bf16.msra.mxu0 0
        %741 = vmatprep.subr.bf16.mxu0 0
        %742 = vmatpush2.bf16.msra.mxu0 0
        %743 = vmatprep.subr.bf16.mxu0 0
        %744 = vmatpush2.bf16.msra.mxu0 0
        %745 = vmatprep.subr.bf16.mxu0 0
        %746 = vmatpush2.bf16.msra.mxu0 0
        %747 = vmatprep.subr.bf16.mxu0 0
        %748 = vmatpush2.bf16.msra.mxu0 0
        %749 = vmatprep.subr.bf16.mxu0 0
        %750 = vmatpush2.bf16.msra.mxu0 0
        %751 = vmatprep.mubr.bf16.mxu0 0
        %752 = vmatmul.mubr.bf16.gmra.mxu0 %v717
        %v753 = vpop.f32.mrf.mxu0
        %v754 = vadd.f32 0.0, %v753
        %v755 = vpop.f32.mrf.mxu0
        %v756 = vpop.f32.mrf.mxu0
        %v757 = vpop.f32.mrf.mxu0
        %758 = vdwg.mxu0
        %v760 = vsel %vm715, %v713, 0
        %762 = vmatprep.subr.bf16.mxu0 0
        %763 = vmatpush1.bf16.msra.mxu0 0
        %764 = vmatprep.subr.bf16.mxu0 0
        %765 = vmatpush1.bf16.msra.mxu0 0
        %766 = vmatprep.subr.bf16.mxu0 0
        %767 = vmatpush1.bf16.msra.mxu0 0
        %768 = vmatprep.subr.bf16.mxu0 0
        %769 = vmatpush1.bf16.msra.mxu0 0
        %770 = vmatprep.subr.bf16.mxu0 0
        %771 = vmatpush1.bf16.msra.mxu0 %v712
        %772 = vmatprep.subr.bf16.mxu0 0
        %773 = vmatpush1.bf16.msra.mxu0 %v711
        %774 = vmatprep.subr.bf16.mxu0 0
        %775 = vmatpush1.bf16.msra.mxu0 %v710
        %776 = vmatprep.subr.bf16.mxu0 0
        %777 = vmatpush1.bf16.msra.mxu0 %v709
        %778 = vmatprep.subr.bf16.mxu0 0
        %779 = vmatpush2.bf16.msra.mxu0 0
        %780 = vmatprep.subr.bf16.mxu0 0
        %781 = vmatpush2.bf16.msra.mxu0 0
        %782 = vmatprep.subr.bf16.mxu0 0
        %783 = vmatpush2.bf16.msra.mxu0 0
        %784 = vmatprep.subr.bf16.mxu0 0
        %785 = vmatpush2.bf16.msra.mxu0 0
        %786 = vmatprep.subr.bf16.mxu0 0
        %787 = vmatpush2.bf16.msra.mxu0 0
        %788 = vmatprep.subr.bf16.mxu0 0
        %789 = vmatpush2.bf16.msra.mxu0 0
        %790 = vmatprep.subr.bf16.mxu0 0
        %791 = vmatpush2.bf16.msra.mxu0 0
        %792 = vmatprep.subr.bf16.mxu0 0
        %793 = vmatpush2.bf16.msra.mxu0 0
        %794 = vmatprep.mubr.bf16.mxu0 0
        %795 = vmatmul.mubr.bf16.gmra.mxu0 %v760
        %v796 = vpop.f32.mrf.mxu0
        %v797 = vadd.f32 %v754, %v796
        %v798 = vpop.f32.mrf.mxu0
        %v799 = vpop.f32.mrf.mxu0
        %v800 = vpop.f32.mrf.mxu0
        %801 = vdwg.mxu0
        %802 = vst [vmem:[%s428] sm:$0xff] %v797
        %v803 = vld [vmem:[%s6] sm:$0xf]
        %v804 = vld [vmem:[%s6 + $0x4] sm:$0xf]
        %v805 = vld [vmem:[%s6 + $0x8] sm:$0xf]
        %v806 = vld [vmem:[%s6 + $0xc] sm:$0xf]
        %v807 = vpack.c.bf16 %v797, %v797
        %v808 = vld [vmem:[%s7] sm:$0xff]
        %v809 = vld [vmem:[%s7 + $0x8] sm:$0xff]
        %v810 = vld [vmem:[%s7 + $0x10] sm:$0xff]
        %v811 = vld [vmem:[%s7 + $0x18] sm:$0xff]
        %813 = vset.pattern.permute.xlu0 0
        %814 = vperm.xlu0 %813, %v808
        %v815 = vpop.permute.xlu0 %814
        %818 = vset.pattern.permute.xlu0 0
        %819 = vperm.xlu0 %818, %v809
        %v820 = vpop.permute.xlu0 %819
        %823 = vset.pattern.permute.xlu0 0
        %824 = vperm.xlu0 %823, %v810
        %v825 = vpop.permute.xlu0 %824
        %828 = vset.pattern.permute.xlu0 0
        %829 = vperm.xlu0 %828, %v811
        %v830 = vpop.permute.xlu0 %829
        %v836 = vunpack.c.l.b16 %v803
        %v837 = vunpack.c.l.b16 %v804
        %v838 = vunpack.c.l.b16 %v805
        %v839 = vunpack.c.l.b16 %v806
        %v840 = vpack.c.b16 %v837, %v836
        %v841 = vpack.c.b16 %v839, %v838
        %v843 = vsel %vm541, %v840, 0
        %v846 = vsel %vm541, %v841, 0
        %v849 = vsel %vm554, %v807, 0
        %851 = vmatprep.subr.bf16.mxu0 0
        %852 = vmatpush1.bf16.msra.mxu0 0
        %853 = vmatprep.subr.bf16.mxu0 0
        %854 = vmatpush1.bf16.msra.mxu0 0
        %855 = vmatprep.subr.bf16.mxu0 0
        %856 = vmatpush1.bf16.msra.mxu0 0
        %857 = vmatprep.subr.bf16.mxu0 0
        %858 = vmatpush1.bf16.msra.mxu0 0
        %859 = vmatprep.subr.bf16.mxu0 0
        %860 = vmatpush1.bf16.msra.mxu0 0
        %861 = vmatprep.subr.bf16.mxu0 0
        %862 = vmatpush1.bf16.msra.mxu0 0
        %863 = vmatprep.subr.bf16.mxu0 0
        %864 = vmatpush1.bf16.msra.mxu0 0
        %865 = vmatprep.subr.bf16.mxu0 0
        %866 = vmatpush1.bf16.msra.mxu0 %v849
        %867 = vmatprep.subr.bf16.mxu0 0
        %868 = vmatpush2.bf16.msra.mxu0 0
        %869 = vmatprep.subr.bf16.mxu0 0
        %870 = vmatpush2.bf16.msra.mxu0 0
        %871 = vmatprep.subr.bf16.mxu0 0
        %872 = vmatpush2.bf16.msra.mxu0 0
        %873 = vmatprep.subr.bf16.mxu0 0
        %874 = vmatpush2.bf16.msra.mxu0 0
        %875 = vmatprep.subr.bf16.mxu0 0
        %876 = vmatpush2.bf16.msra.mxu0 0
        %877 = vmatprep.subr.bf16.mxu0 0
        %878 = vmatpush2.bf16.msra.mxu0 0
        %879 = vmatprep.subr.bf16.mxu0 0
        %880 = vmatpush2.bf16.msra.mxu0 0
        %881 = vmatprep.subr.bf16.mxu0 0
        %882 = vmatpush2.bf16.msra.mxu0 0
        %883 = vmatprep.mubr.bf16.mxu0 0
        %884 = vmatmul.mubr.bf16.gmra.mxu0 %v843
        %v885 = vpop.f32.mrf.mxu0
        %v886 = vadd.f32 %v815, %v885
        %v887 = vpop.f32.mrf.mxu0
        %v888 = vpop.f32.mrf.mxu0
        %v889 = vadd.f32 %v820, %v888
        %v890 = vpop.f32.mrf.mxu0
        %891 = vmatprep.mubr.bf16.mxu0 0
        %892 = vmatmul.mubr.bf16.gmra.mxu0 %v846
        %v893 = vpop.f32.mrf.mxu0
        %v894 = vadd.f32 %v825, %v893
        %v895 = vpop.f32.mrf.mxu0
        %v896 = vpop.f32.mrf.mxu0
        %v897 = vadd.f32 %v830, %v896
        %v898 = vpop.f32.mrf.mxu0
        %899 = vdwg.mxu0
        %900 = vst [vmem:[%s414] sm:$0xff] %v886
        %901 = vst [vmem:[%s414 + $0x8] sm:$0xff] %v889
        %902 = vst [vmem:[%s414 + $0x10] sm:$0xff] %v894
        %903 = vst [vmem:[%s414 + $0x18] sm:$0xff] %v897
        %s904 = sand.u32 %s229, 1
        %s905 = scalar_lea.sflag [#allocation3], %s904
        %s906 = sand.u32 %s229, 1
        %s907 = smul.addr %s906, 32
        %s908 = scalar_lea.vmem [#allocation2], %s907
        %s909 = sand.u32 %s32, 1
        %s910 = scalar_lea.sflag [#allocation5], %s909
        %s911 = sand.u32 %s257, 1
        %s912 = smul.addr %s911, 8
        %s913 = scalar_lea.vmem [#allocation4], %s912
        %s914 = sand.u32 %s32, 1
        %s915 = scalar_lea.sflag [#allocation5], %s914
        %s916 = sand.u32 %s285, 1
        %s917 = smul.addr %s916, 8
        %s918 = scalar_lea.vmem [#allocation6], %s917
        %s919 = sand.u32 %s313, 1
        %s920 = scalar_lea.sflag [#allocation8], %s919
        %s921 = sand.u32 %s313, 1
        %s922 = scalar_lea.vmem [#allocation7], %s921
        // Predicated region
        $region53: #{tpu_custom_call.1} parent=51 // pred_check
          %p923 = pneg %p239
        $region54: #{tpu_custom_call.1} parent=51 // pred_check_branch
          %925 = sbr.rel (%p923) target = $region56
        $region55: #{tpu_custom_call.1} parent=51 // pred_region
          %s927 = ssub.s32 512, 512
          %928 = vsyncadd %s905, %s927
          %s929 = smul.addr %s36, 4
          %s930 = sadd.s32 %s37, %s929
          %s931 = smul.addr %s930, 128
          %s932 = scalar_lea.hbm %s8, %s931
          %s933 = sshll.u32 %s908, 4
          %s934 = int_to_ptr.vmem [resolvable:$true] %s933
          %939 = dma.vmem_to_hbm [thread:$0]  %s934, 512, %s932, %s905, 128, 128, 8
        $region56: #{tpu_custom_call.1} parent=51 // pred_fallthru
          _
        // Predicated region
        $region57: #{tpu_custom_call.1} parent=51 // pred_check
          %p940 = pneg %p267
        $region58: #{tpu_custom_call.1} parent=51 // pred_check_branch
          %942 = sbr.rel (%p940) target = $region60
        $region59: #{tpu_custom_call.1} parent=51 // pred_region
          %s944 = ssub.s32 128, 128
          %945 = vsyncadd %s910, %s944
          %s946 = sadd.s32 %s37, %s36
          %s947 = smul.addr %s946, 128
          %s948 = scalar_lea.hbm %s9, %s947
          %s950 = sshll.u32 %s913, 4
          %s951 = int_to_ptr.vmem [resolvable:$true] %s950
          %953 = dma.vmem_to_hbm [thread:$0]  %s951, 128, %s948, %s910
        $region60: #{tpu_custom_call.1} parent=51 // pred_fallthru
          _
        // Predicated region
        $region61: #{tpu_custom_call.1} parent=51 // pred_check
          %p954 = pneg %p295
        $region62: #{tpu_custom_call.1} parent=51 // pred_check_branch
          %956 = sbr.rel (%p954) target = $region64
        $region63: #{tpu_custom_call.1} parent=51 // pred_region
          %s958 = ssub.s32 128, 128
          %959 = vsyncadd %s915, %s958
          %s960 = sadd.s32 %s37, %s36
          %s961 = smul.addr %s960, 128
          %s962 = scalar_lea.hbm %s10, %s961
          %s964 = sshll.u32 %s918, 4
          %s965 = int_to_ptr.vmem [resolvable:$true] %s964
          %967 = dma.vmem_to_hbm [thread:$0]  %s965, 128, %s962, %s915
        $region64: #{tpu_custom_call.1} parent=51 // pred_fallthru
          _
        // Predicated region
        $region65: #{tpu_custom_call.1} parent=51 // pred_check
          %p968 = pneg %p323
        $region66: #{tpu_custom_call.1} parent=51 // pred_check_branch
          %970 = sbr.rel (%p968) target = $region68
        $region67: #{tpu_custom_call.1} parent=51 // pred_region
          %s972 = ssub.s32 16, 16
          %973 = vsyncadd %s920, %s972
          %s974 = sadd.s32 %s37, %s36
          %s975 = smul.addr %s974, 16
          %s976 = scalar_lea.hbm %s11, %s975
          %s978 = sshll.u32 %s922, 4
          %s979 = int_to_ptr.vmem [resolvable:$true] %s978
          %981 = dma.vmem_to_hbm [thread:$0]  %s979, 16, %s976, %s920
        $region68: #{tpu_custom_call.1} parent=51 // pred_fallthru
          _
      $region52: #{tpu_custom_call.1} parent=5 // pred_fallthru
        _
      %p982 = scmp.le.s32.totalorder 2, %s27
      // Predicated region
      $region69: #{tpu_custom_call.1} parent=5 // pred_check
        %p983 = pneg %p982
      $region70: #{tpu_custom_call.1} parent=5 // pred_check_branch
        %985 = sbr.rel (%p983) target = $region72
      $region71: #{tpu_custom_call.1} parent=5 // pred_region
        %s986 = ssub.s32 %s27, 2
        // Predicated region
        $region73: #{tpu_custom_call.1} parent=71 // pred_check
          %p987 = pneg %p245
        $region74: #{tpu_custom_call.1} parent=71 // pred_check_branch
          %989 = sbr.rel (%p987) target = $region76
        $region75: #{tpu_custom_call.1} parent=71 // pred_region
          %s990 = sand.u32 %s230, 1
          %s991 = scalar_lea.sflag [#allocation3], %s990
          %s992 = sand.u32 %s230, 1
          %s993 = smul.addr %s992, 32
          %s994 = scalar_lea.vmem [#allocation2], %s993
          %995 = dma.done %s991, 512
        $region76: #{tpu_custom_call.1} parent=71 // pred_fallthru
          _
        // Predicated region
        $region77: #{tpu_custom_call.1} parent=71 // pred_check
          %p996 = pneg %p273
        $region78: #{tpu_custom_call.1} parent=71 // pred_check_branch
          %998 = sbr.rel (%p996) target = $region80
        $region79: #{tpu_custom_call.1} parent=71 // pred_region
          %s999 = sand.u32 %s33, 1
          %s1000 = scalar_lea.sflag [#allocation5], %s999
          %s1001 = sand.u32 %s258, 1
          %s1002 = smul.addr %s1001, 8
          %s1003 = scalar_lea.vmem [#allocation4], %s1002
          %1004 = dma.done %s1000, 128
        $region80: #{tpu_custom_call.1} parent=71 // pred_fallthru
          _
        // Predicated region
        $region81: #{tpu_custom_call.1} parent=71 // pred_check
          %p1005 = pneg %p301
        $region82: #{tpu_custom_call.1} parent=71 // pred_check_branch
          %1007 = sbr.rel (%p1005) target = $region84
        $region83: #{tpu_custom_call.1} parent=71 // pred_region
          %s1008 = sand.u32 %s33, 1
          %s1009 = scalar_lea.sflag [#allocation5], %s1008
          %s1010 = sand.u32 %s286, 1
          %s1011 = smul.addr %s1010, 8
          %s1012 = scalar_lea.vmem [#allocation6], %s1011
          %1013 = dma.done %s1009, 128
        $region84: #{tpu_custom_call.1} parent=71 // pred_fallthru
          _
        // Predicated region
        $region85: #{tpu_custom_call.1} parent=71 // pred_check
          %p1014 = pneg %p329
        $region86: #{tpu_custom_call.1} parent=71 // pred_check_branch
          %1016 = sbr.rel (%p1014) target = $region88
        $region87: #{tpu_custom_call.1} parent=71 // pred_region
          %s1017 = sand.u32 %s314, 1
          %s1018 = scalar_lea.sflag [#allocation8], %s1017
          %s1019 = sand.u32 %s314, 1
          %s1020 = scalar_lea.vmem [#allocation7], %s1019
          %1021 = dma.done %s1018, 16
        $region88: #{tpu_custom_call.1} parent=71 // pred_fallthru
          _
      $region72: #{tpu_custom_call.1} parent=5 // pred_fallthru
        _
    $region6: #{tpu_custom_call.1} parent=1 // loop_footer
      %s31 = sadd.s32 1, %s27
    $region7: #{tpu_custom_call.1} parent=1 // loop_footer_branch
      %26 = sbr.rel target = $region3
    $region8: #{tpu_custom_call.1} parent=1 // loop_exit
      _
    %1022 = vsyncpa [#allocation3], 1
    %s1023 = scalar_lea.sflag [#allocation3], 1
    %1024 = vsyncpa %s1023, 1
    %1025 = vsyncpa [#allocation5], 1
    %s1026 = scalar_lea.sflag [#allocation5], 1
    %1027 = vsyncpa %s1026, 1
    %1028 = vsyncpa [#allocation8], 1
    %s1029 = scalar_lea.sflag [#allocation8], 1
    %1030 = vsyncpa %s1029, 1

</llo_original>
